<compile_context>
chip_gen: v7x
topology: tpu7x:2x2x1
jax: 0.10.0
libtpu: 0.0.40
codegen_flags: <defaults>
</compile_context>

<pallas_src>
import math
import numpy as np
import jax
import jax.numpy as jnp
from jax.experimental import pallas as pl
from jax.experimental.pallas import tpu as pltpu

# ---- model config (mirrors `args` of the PyTorch module) ----
STAGES = [2, 2, 2]
GROWTH = [8, 8, 8]
NUM_CLASSES = 10
POOL_SIZE = 8                          # AvgPool2d(8); spatial must be 8x8 at the pool
INIT_FEATURES = 2 * GROWTH[0]          # 16 channels after init_conv
NUM_FEATURES = INIT_FEATURES           # dense blocks are identity here (see TODO below)
BN_EPS = 1e-5
CIN = 3

H = W = POOL_SIZE
K_IM2COL = 3 * (W + 2) * CIN           # 90 = 3 kernel rows * padded width * Cin
K_PAD = 128                            # lane-dense K dim for the merged conv matmul
WCOUT = W * INIT_FEATURES              # 128: lane-dense conv-output width
CLS_PAD = 128                          # classes padded to a full lane width
BM_IMAGES = 16                         # images per grid tile -> M = 16*8 = 128 MXU rows

# MXU operand precision: bf16 runs at full rate on the 256-wide v6e/v7x MXUs (f32
# operands halve throughput). Accumulation is always f32 (preferred_element_type) and
# all elementwise BN/ReLU math stays f32 (no bf16 VPU on v5e).
MXU_DTYPE = jnp.bfloat16


def _round_up(x, m):
    return (x + m - 1) // m * m


# ---------------- fused Pallas kernel (one batch tile per grid step) ----------------

def _densenet_fused_kernel(x_ref, wconv_ref, bconv_ref, whead_ref, bhead_ref, o_ref):
    """Whole forward for one tile of BM images.

    x_ref     : (BM*H, K_PAD)     bf16  ky-merged, K-padded im2col rows (n-major, h-minor)
    wconv_ref : (K_PAD, W*Cout)   bf16  merged block-Toeplitz conv weight (BN scale folded)
    bconv_ref : (1, W*Cout)       f32   BN shift, tiled over W
    whead_ref : (W*Cout, CLS_PAD) bf16  (lin_w / (H*W)).T tiled over W, classes padded
    bhead_ref : (1, CLS_PAD)      f32   linear bias, zero-padded
    o_ref     : (BM, CLS_PAD)     f32   padded logits (lane-dense store)
    """
    bm, cls_pad = o_ref.shape
    h = x_ref.shape[0] // bm

    # --- 3x3 conv (BN scale folded) as ONE lane-dense MXU matmul, f32 accumulation.
    acc = jnp.dot(x_ref[...], wconv_ref[...], preferred_element_type=jnp.float32)

    # --- BN shift (folded bias) + ReLU, f32 elementwise.
    y = jnp.maximum(acc + bconv_ref[...], 0.0)

    # --- AvgPool(8) + flatten + Linear folded into one MXU matmul over (W, Cout);
    #     z holds per-(n, h) partial logits.
    z = jnp.dot(y.astype(whead_ref.dtype), whead_ref[...],
                preferred_element_type=jnp.float32)            # (BM*H, CLS_PAD)

    # --- Sum the H partial logits per image. Each image's H=8 rows are exactly one
    #     (8, 128) sublane tile, so this is a single free XLU sublane reduce
    #     (no selector matmul, no iota/compare VPU work).
    o_ref[...] = z.reshape(bm, h, cls_pad).sum(axis=1) + bhead_ref[...]


# ---------------- parameter init (mirrors the PyTorch module init) ----------------

def init_params(key):
    k_conv, k_lin = jax.random.split(key)
    cout = INIT_FEATURES
    # nn.Conv2d(3, 16, 3, padding=1, bias=False); init normal(0, sqrt(2/(kh*kw*cout)))
    n = 3 * 3 * cout
    conv_w = jax.random.normal(k_conv, (cout, 3, 3, 3), jnp.float32) * math.sqrt(2.0 / n)
    # nn.BatchNorm2d: weight=1, bias=0; running stats default (mean=0, var=1)
    bn_gamma = jnp.ones((NUM_FEATURES,), jnp.float32)
    bn_beta = jnp.zeros((NUM_FEATURES,), jnp.float32)
    bn_mean = jnp.zeros((NUM_FEATURES,), jnp.float32)
    bn_var = jnp.ones((NUM_FEATURES,), jnp.float32)
    # nn.Linear(NUM_FEATURES, 10): default uniform(+-1/sqrt(fan_in)) weight
    # (torch layout (out, in)); bias zeroed by the module's init loop.
    bound = 1.0 / math.sqrt(NUM_FEATURES)
    lin_w = jax.random.uniform(k_lin, (NUM_CLASSES, NUM_FEATURES), jnp.float32,
                               minval=-bound, maxval=bound)
    lin_b = jnp.zeros((NUM_CLASSES,), jnp.float32)
    return dict(conv_w=conv_w, bn_gamma=bn_gamma, bn_beta=bn_beta,
                bn_mean=bn_mean, bn_var=bn_var, lin_w=lin_w, lin_b=lin_b)


# ---------------- one-time parameter folding (host side, runs once) ----------------

def fold_params(params, eps=BN_EPS):
    """Fold BN(eval) into the conv, build the merged block-Toeplitz conv weight
    (all 3 kernel rows concatenated along K, K zero-padded to 128) and the
    pool+flatten+linear head weight. Pure one-time preprocessing."""
    conv_w = np.asarray(params["conv_w"], np.float32)          # (Cout, Cin, 3, 3)
    cout, cin = conv_w.shape[0], conv_w.shape[1]

    gamma = np.asarray(params["bn_gamma"], np.float32)
    beta = np.asarray(params["bn_beta"], np.float32)
    mean = np.asarray(params["bn_mean"], np.float32)
    var = np.asarray(params["bn_var"], np.float32)
    scale = gamma / np.sqrt(var + eps)                         # (Cout,)
    shift = beta - mean * scale                                # (Cout,)

    # BN scale folded into the conv weight; reorder to (ky, kx, Cin, Cout)
    wk = np.transpose(conv_w * scale[:, None, None, None], (2, 3, 1, 0))

    # Merged block-Toeplitz weight: the three kernel rows are stacked along K
    # (row offset ky*(W+2)*Cin) so the whole conv is ONE (K_PAD, W*Cout) matmul.
    # Rows [K_IM2COL, K_PAD) stay zero to match the zero-padded im2col K axis.
    w_conv = np.zeros((K_PAD, W * cout), np.float32)
    for ky in range(3):
        for kx in range(3):
            for wo in range(W):
                wi = wo + kx                                   # padded input column
                r0 = ky * (W + 2) * cin + wi * cin
                w_conv[r0:r0 + cin, wo * cout:(wo + 1) * cout] = wk[ky, kx]
    b_conv = np.tile(shift, W)[None, :]                        # (1, W*Cout)

    # AvgPool(8) + flatten + Linear folded into one matmul: 1/(H*W) folded into the
    # weight, classes zero-padded to 128 lanes (lane-dense store).
    lin_w = np.asarray(params["lin_w"], np.float32)            # (num_classes, Cout)
    lin_b = np.asarray(params["lin_b"], np.float32)
    ncls = lin_w.shape[0]
    w_head = np.zeros((W * cout, CLS_PAD), np.float32)
    for wo in range(W):
        w_head[wo * cout:(wo + 1) * cout, :ncls] = lin_w.T / float(H * W)
    b_head = np.zeros((1, CLS_PAD), np.float32)
    b_head[0, :ncls] = lin_b

    return dict(w_conv=jnp.asarray(w_conv, MXU_DTYPE),
                b_conv=jnp.asarray(b_conv, jnp.float32),
                w_head=jnp.asarray(w_head, MXU_DTYPE),
                b_head=jnp.asarray(b_head, jnp.float32))


# ---------------- forward ----------------

def densenet_forward(folded, x_nchw):
    """x_nchw: (N, 3, 8, 8) like the PyTorch module. Returns (N, NUM_CLASSES) f32."""
    N, cin, h, w = x_nchw.shape
    assert h == POOL_SIZE and w == POOL_SIZE, "AvgPool2d(8) must reduce spatial to 1x1"
    # TODO(synk): _DenseBlock / _Transition / make_divisible are not defined in the
    # reference source, so the dense blocks / transitions cannot be reproduced; they
    # are modeled as identity (no channel growth, no downsampling).
    n_pad = _round_up(max(N, 1), BM_IMAGES)                    # full MXU M per tile
    x = jnp.transpose(x_nchw, (0, 2, 3, 1)).astype(jnp.float32)          # NHWC
    if n_pad != N:
        x = jnp.pad(x, ((0, n_pad - N), (0, 0), (0, 0), (0, 0)))
    xp = jnp.pad(x, ((0, 0), (1, 1), (1, 1), (0, 0)))                    # conv pad=1
    # ky-merged im2col: row (n, h) = [xp[n,h,:,:], xp[n,h+1,:,:], xp[n,h+2,:,:]]
    # flattened; K zero-padded 90 -> 128 so the kernel LHS is lane-dense; bf16 so the
    # HBM->VMEM DMA moves half the bytes and the kernel does no casts on the LHS.
    rows = jnp.concatenate(
        [xp[:, dy:dy + h].reshape(n_pad, h, (w + 2) * cin) for dy in range(3)],
        axis=-1)                                                          # (n_pad, H, 90)
    rows = jnp.pad(rows, ((0, 0), (0, 0), (0, K_PAD - rows.shape[-1])))
    rows = rows.reshape(n_pad * h, K_PAD).astype(MXU_DTYPE)

    grid = (n_pad // BM_IMAGES,)
    # TODO(synk): if real _DenseBlock/_Transition layers (channel growth, larger
    # spatial) are added, re-size tiles against v7x's 64 MiB physical / 32 MiB scoped
    # VMEM and set pltpu.CompilerParams(vmem_limit_bytes=...) explicitly.
    out_pad = pl.pallas_call(
        _densenet_fused_kernel,
        out_shape=jax.ShapeDtypeStruct((n_pad, CLS_PAD), jnp.float32),
        grid=grid,
        in_specs=[
            pl.BlockSpec((BM_IMAGES * h, K_PAD), lambda i: (i, 0)),   # pipelined input
            pl.BlockSpec((K_PAD, WCOUT), lambda i: (0, 0)),     # weights: constant
            pl.BlockSpec((1, WCOUT), lambda i: (0, 0)),         # index_map -> DMA'd
            pl.BlockSpec((WCOUT, CLS_PAD), lambda i: (0, 0)),   # once, VMEM-resident
            pl.BlockSpec((1, CLS_PAD), lambda i: (0, 0)),
        ],
        out_specs=pl.BlockSpec((BM_IMAGES, CLS_PAD), lambda i: (i, 0)),
        compiler_params=pltpu.CompilerParams(
            dimension_semantics=("parallel",)),   # v7x: shard batch tiles across 2 TCs
    )(rows, folded["w_conv"], folded["b_conv"], folded["w_head"], folded["b_head"])
    return out_pad[:N, :NUM_CLASSES]


# ---------------- pure-JAX reference (sanity check only) ----------------

def _reference_forward(params, x_nchw, eps=BN_EPS):
    x = jnp.transpose(x_nchw, (0, 2, 3, 1)).astype(jnp.float32)
    w = jnp.transpose(params["conv_w"], (2, 3, 1, 0))                     # HWIO
    y = jax.lax.conv_general_dilated(x, w, (1, 1), "SAME",
                                     dimension_numbers=("NHWC", "HWIO", "NHWC"))
    scale = params["bn_gamma"] / jnp.sqrt(params["bn_var"] + eps)
    shift = params["bn_beta"] - params["bn_mean"] * scale
    y = jnp.maximum(y * scale + shift, 0.0)
    pooled = jnp.mean(y, axis=(1, 2))                                     # AvgPool2d(8)
    return pooled @ params["lin_w"].T + params["lin_b"]


if __name__ == "__main__":
    key = jax.random.PRNGKey(0)
    k_x, k_p = jax.random.split(key)
    # NCHW input like the PyTorch module; batch 32 -> two grid tiles of M=128 rows
    # (fills the 256-wide v6e/v7x MXU far better than the previous batch of 4, and
    # gives v7x's second TensorCore a tile to run).
    x = jax.random.normal(k_x, (32, 3, POOL_SIZE, POOL_SIZE), jnp.float32)
    params = init_params(k_p)
    folded = fold_params(params)                      # one-time preprocessing

    fwd = jax.jit(densenet_forward)
    out = jax.block_until_ready(fwd(folded, x))
    assert out.shape == (32, NUM_CLASSES) and out.dtype == jnp.float32

    ref = jax.block_until_ready(_reference_forward(params, x))
    # bf16 MXU operands introduce ~1e-2 relative error vs the f32 reference; set
    # MXU_DTYPE=jnp.float32 above if bit-closeness is required (half MXU rate).
    np.testing.assert_allclose(np.asarray(out), np.asarray(ref), rtol=5e-2, atol=1e-2)
    print("KERNEL_OK")
</pallas_src>

<mosaic_0001>
module attributes {stable_mosaic.version = 11 : i64} {
  func.func @_densenet_fused_kernel(%arg0: i32, %arg1: memref<128x128xbf16, #tpu.memory_space<vmem>>, %arg2: memref<128x128xbf16, #tpu.memory_space<vmem>>, %arg3: memref<1x128xf32, #tpu.memory_space<vmem>>, %arg4: memref<128x128xbf16, #tpu.memory_space<vmem>>, %arg5: memref<1x128xf32, #tpu.memory_space<vmem>>, %arg6: memref<16x128xf32, #tpu.memory_space<vmem>>) attributes {dimension_semantics = [#tpu.dimension_semantics<parallel>], iteration_bounds = array<i64: 2>, scalar_prefetch = 0 : i64, scratch_operands = 0 : i64, tpu.core_type = #tpu.core_type<tc>, window_params = [{transform_indices = @transform_0, window_bounds = array<i64: 128, 128>}, {pipeline_mode = #tpu.pipeline_mode<synchronous>, transform_indices = @transform_1, window_bounds = array<i64: 128, 128>}, {pipeline_mode = #tpu.pipeline_mode<synchronous>, transform_indices = @transform_2, window_bounds = array<i64: 1, 128>}, {pipeline_mode = #tpu.pipeline_mode<synchronous>, transform_indices = @transform_3, window_bounds = array<i64: 128, 128>}, {pipeline_mode = #tpu.pipeline_mode<synchronous>, transform_indices = @transform_4, window_bounds = array<i64: 1, 128>}, {transform_indices = @transform_5, window_bounds = array<i64: 16, 128>}]} {
    %c0 = arith.constant 0 : index
    %c0_0 = arith.constant 0 : index
    %0 = vector.load %arg1[%c0, %c0_0] : memref<128x128xbf16, #tpu.memory_space<vmem>>, vector<128x128xbf16>
    %c0_1 = arith.constant 0 : index
    %c0_2 = arith.constant 0 : index
    %1 = vector.load %arg2[%c0_1, %c0_2] : memref<128x128xbf16, #tpu.memory_space<vmem>>, vector<128x128xbf16>
    %cst = arith.constant dense<0.000000e+00> : vector<128x128xf32>
    %2 = tpu.matmul %0, %1, %cst {dimension_numbers = #tpu.dot_dimension_numbers<[1], [0], [0], [1], [0, 0, 1, 1], [], []>} : vector<128x128xbf16>, vector<128x128xbf16>, vector<128x128xf32> -> vector<128x128xf32>
    %c0_3 = arith.constant 0 : index
    %c0_4 = arith.constant 0 : index
    %3 = vector.load %arg3[%c0_3, %c0_4] : memref<1x128xf32, #tpu.memory_space<vmem>>, vector<1x128xf32>
    %4 = vector.broadcast %3 : vector<1x128xf32> to vector<128x128xf32>
    %5 = arith.addf %2, %4 : vector<128x128xf32>
    %cst_5 = arith.constant 0.000000e+00 : f32
    %6 = vector.broadcast %cst_5 : f32 to vector<128x128xf32>
    %7 = arith.maximumf %5, %6 : vector<128x128xf32>
    %8 = arith.truncf %7 : vector<128x128xf32> to vector<128x128xbf16>
    %c0_6 = arith.constant 0 : index
    %c0_7 = arith.constant 0 : index
    %9 = vector.load %arg4[%c0_6, %c0_7] : memref<128x128xbf16, #tpu.memory_space<vmem>>, vector<128x128xbf16>
    %cst_8 = arith.constant dense<0.000000e+00> : vector<128x128xf32>
    %10 = tpu.matmul %8, %9, %cst_8 {dimension_numbers = #tpu.dot_dimension_numbers<[1], [0], [0], [1], [0, 0, 1, 1], [], []>} : vector<128x128xbf16>, vector<128x128xbf16>, vector<128x128xf32> -> vector<128x128xf32>
    %11 = vector.shape_cast %10 : vector<128x128xf32> to vector<16x8x128xf32>
    %cst_9 = arith.constant dense<0.000000e+00> : vector<16x128xf32>
    %12 = vector.multi_reduction <add>, %11, %cst_9 [1] : vector<16x8x128xf32> to vector<16x128xf32>
    %c0_10 = arith.constant 0 : index
    %c0_11 = arith.constant 0 : index
    %13 = vector.load %arg5[%c0_10, %c0_11] : memref<1x128xf32, #tpu.memory_space<vmem>>, vector<1x128xf32>
    %14 = vector.broadcast %13 : vector<1x128xf32> to vector<16x128xf32>
    %15 = arith.addf %12, %14 : vector<16x128xf32>
    %c0_12 = arith.constant 0 : index
    %c0_13 = arith.constant 0 : index
    %16 = vector.load %arg6[%c0_12, %c0_13] : memref<16x128xf32, #tpu.memory_space<vmem>>, vector<16x128xf32>
    tpu.vector_store %arg6[%c0_12, %c0_13], %15 {strides = array<i32>} : memref<16x128xf32, #tpu.memory_space<vmem>>, vector<16x128xf32>,
    return
  }
  func.func @transform_0(%arg0: i32) -> (i32, i32) {
    %c0_i32 = arith.constant 0 : i32
    %c0_i32_0 = arith.constant 0 : i32
    return %arg0, %c0_i32 : i32, i32
  }
  func.func @transform_1(%arg0: i32) -> (i32, i32) {
    %c0_i32 = arith.constant 0 : i32
    %c0_i32_0 = arith.constant 0 : i32
    %c0_i32_1 = arith.constant 0 : i32
    return %c0_i32, %c0_i32_0 : i32, i32
  }
  func.func @transform_2(%arg0: i32) -> (i32, i32) {
    %c0_i32 = arith.constant 0 : i32
    %c0_i32_0 = arith.constant 0 : i32
    %c0_i32_1 = arith.constant 0 : i32
    return %c0_i32, %c0_i32_0 : i32, i32
  }
  func.func @transform_3(%arg0: i32) -> (i32, i32) {
    %c0_i32 = arith.constant 0 : i32
    %c0_i32_0 = arith.constant 0 : i32
    %c0_i32_1 = arith.constant 0 : i32
    return %c0_i32, %c0_i32_0 : i32, i32
  }
  func.func @transform_4(%arg0: i32) -> (i32, i32) {
    %c0_i32 = arith.constant 0 : i32
    %c0_i32_0 = arith.constant 0 : i32
    %c0_i32_1 = arith.constant 0 : i32
    return %c0_i32, %c0_i32_0 : i32, i32
  }
  func.func @transform_5(%arg0: i32) -> (i32, i32) {
    %c0_i32 = arith.constant 0 : i32
    %c0_i32_0 = arith.constant 0 : i32
    return %arg0, %c0_i32 : i32, i32
  }
}

</mosaic_0001>

<llo_original>
// kernel: densenet_forward.1
$region0: #{densenet_forward.1}
  #allocation0 [shape = 'u32[]', space=smem, size = 0x4, offset = 0x4, fixed_abs, tag = 'smem constant byte address 0x4 - core index']
  #allocation1 [shape = 'u32[144,128]{1,0:T(1,128)}', space=vmem, size = 0x12000, scoped, tag = 'internal scratch']
  %s0 = inlined_call_operand.vmem [shape: bf16[256,128], index: 0, kind: input, shape index: {}]
  %s1 = inlined_call_operand.vmem [shape: bf16[128,128], index: 1, kind: input, shape index: {}]
  %s2 = inlined_call_operand.vmem [shape: f32[1,128], index: 2, kind: input, shape index: {}]
  %s3 = inlined_call_operand.vmem [shape: bf16[128,128], index: 3, kind: input, shape index: {}]
  %s4 = inlined_call_operand.vmem [shape: f32[1,128], index: 4, kind: input, shape index: {}]
  %s5 = inlined_call_operand.vmem [shape: f32[32,128], index: 5, kind: output, shape index: {}]
  %s6 = sld [smem:[#allocation0]]
  $region53: #{densenet_forward.1} parent=0
    _
  %s8 = ssub.s32 1, %s6
  %s9 = scalar_select 0, %s8, %s6
  loop: start=0, step=1, limit=4
  $region2: #{densenet_forward.1} parent=0 // loop_pre_header
    _
  $region3: #{densenet_forward.1} parent=0 // loop_header
    %s11 = sphi 0, %s15
    %p12 = scmp.ge.s32.totalorder %s11, 4
    %s21 = sphi 0, %s23
    %s24 = sphi 0, %s21
    %s25 = sphi 0, %s24
    %s41 = sphi 0, %s25
    %s45 = sphi 0, %s45
    %s47 = sphi 0, %s45
    %s48 = sphi 0, %s47
    %s62 = sphi 0, %s48
    %s66 = sphi 0, %s66
    %s68 = sphi 0, %s66
    %s69 = sphi 0, %s68
    %s83 = sphi 0, %s69
    %s87 = sphi 0, %s87
    %s89 = sphi 0, %s87
    %s90 = sphi 0, %s89
    %s104 = sphi 0, %s90
    %s108 = sphi 0, %s108
    %s110 = sphi 0, %s108
    %s111 = sphi 0, %s110
    %s125 = sphi 0, %s111
    %s131 = sphi 0, %s133
    %s134 = sphi 0, %s131
    %s135 = sphi 0, %s134
    %s151 = sphi 0, %s135
  $region4: #{densenet_forward.1} parent=0 // loop_header_branch
    %14 = sbr.rel (%p12) target = $region8
  $region5: #{densenet_forward.1} parent=0 // loop_body
    %s16 = ssub.s32 %s11, 1
    %s17 = ssub.s32 %s11, 2
    %s18 = sadd.s32 %s11, 1
    %s19 = ssub.s32 %s11, %s18
    %p20 = scmp.eq.s32.totalorder %s19, 0
    %s22 = sadd.s32 %s21, 1
    %s23 = scalar_select %p20, %s21, %s22
    %p26 = pneg %p20
    %p27 = scmp.eq.s32.totalorder %s11, 1
    %p28 = por %p26, %p27
    %p29 = scmp.ne.s32.totalorder %s21, %s24
    %p30 = scmp.eq.s32.totalorder %s11, 0
    %p31 = por %p29, %p30
    %p32 = scmp.ne.s32.totalorder %s21, %s24
    %p33 = scmp.eq.s32.totalorder %s16, 1
    %p34 = por %p32, %p33
    %p35 = scmp.ne.s32.totalorder %s24, %s25
    %p36 = scmp.eq.s32.totalorder %s16, 0
    %p37 = por %p35, %p36
    %p38 = scmp.ne.s32.totalorder %s24, %s25
    %p39 = scmp.eq.s32.totalorder %s17, 1
    %p40 = por %p38, %p39
    %p42 = scmp.ne.s32.totalorder %s25, %s41
    %p43 = scmp.eq.s32.totalorder %s17, 0
    %p44 = por %p42, %p43
    %s46 = sadd.s32 %s45, 1
    %p49 = scmp.eq.s32.totalorder %s11, 1
    %p50 = scmp.ne.s32.totalorder %s45, %s47
    %p51 = scmp.eq.s32.totalorder %s11, 0
    %p52 = por %p50, %p51
    %p53 = scmp.ne.s32.totalorder %s45, %s47
    %p54 = scmp.eq.s32.totalorder %s16, 1
    %p55 = por %p53, %p54
    %p56 = scmp.ne.s32.totalorder %s47, %s48
    %p57 = scmp.eq.s32.totalorder %s16, 0
    %p58 = por %p56, %p57
    %p59 = scmp.ne.s32.totalorder %s47, %s48
    %p60 = scmp.eq.s32.totalorder %s17, 1
    %p61 = por %p59, %p60
    %p63 = scmp.ne.s32.totalorder %s48, %s62
    %p64 = scmp.eq.s32.totalorder %s17, 0
    %p65 = por %p63, %p64
    %s67 = sadd.s32 %s66, 1
    %p70 = scmp.eq.s32.totalorder %s11, 1
    %p71 = scmp.ne.s32.totalorder %s66, %s68
    %p72 = scmp.eq.s32.totalorder %s11, 0
    %p73 = por %p71, %p72
    %p74 = scmp.ne.s32.totalorder %s66, %s68
    %p75 = scmp.eq.s32.totalorder %s16, 1
    %p76 = por %p74, %p75
    %p77 = scmp.ne.s32.totalorder %s68, %s69
    %p78 = scmp.eq.s32.totalorder %s16, 0
    %p79 = por %p77, %p78
    %p80 = scmp.ne.s32.totalorder %s68, %s69
    %p81 = scmp.eq.s32.totalorder %s17, 1
    %p82 = por %p80, %p81
    %p84 = scmp.ne.s32.totalorder %s69, %s83
    %p85 = scmp.eq.s32.totalorder %s17, 0
    %p86 = por %p84, %p85
    %s88 = sadd.s32 %s87, 1
    %p91 = scmp.eq.s32.totalorder %s11, 1
    %p92 = scmp.ne.s32.totalorder %s87, %s89
    %p93 = scmp.eq.s32.totalorder %s11, 0
    %p94 = por %p92, %p93
    %p95 = scmp.ne.s32.totalorder %s87, %s89
    %p96 = scmp.eq.s32.totalorder %s16, 1
    %p97 = por %p95, %p96
    %p98 = scmp.ne.s32.totalorder %s89, %s90
    %p99 = scmp.eq.s32.totalorder %s16, 0
    %p100 = por %p98, %p99
    %p101 = scmp.ne.s32.totalorder %s89, %s90
    %p102 = scmp.eq.s32.totalorder %s17, 1
    %p103 = por %p101, %p102
    %p105 = scmp.ne.s32.totalorder %s90, %s104
    %p106 = scmp.eq.s32.totalorder %s17, 0
    %p107 = por %p105, %p106
    %s109 = sadd.s32 %s108, 1
    %p112 = scmp.eq.s32.totalorder %s11, 1
    %p113 = scmp.ne.s32.totalorder %s108, %s110
    %p114 = scmp.eq.s32.totalorder %s11, 0
    %p115 = por %p113, %p114
    %p116 = scmp.ne.s32.totalorder %s108, %s110
    %p117 = scmp.eq.s32.totalorder %s16, 1
    %p118 = por %p116, %p117
    %p119 = scmp.ne.s32.totalorder %s110, %s111
    %p120 = scmp.eq.s32.totalorder %s16, 0
    %p121 = por %p119, %p120
    %p122 = scmp.ne.s32.totalorder %s110, %s111
    %p123 = scmp.eq.s32.totalorder %s17, 1
    %p124 = por %p122, %p123
    %p126 = scmp.ne.s32.totalorder %s111, %s125
    %p127 = scmp.eq.s32.totalorder %s17, 0
    %p128 = por %p126, %p127
    %s129 = ssub.s32 %s11, %s18
    %p130 = scmp.eq.s32.totalorder %s129, 0
    %s132 = sadd.s32 %s131, 1
    %s133 = scalar_select %p130, %s131, %s132
    %p136 = pneg %p130
    %p137 = scmp.eq.s32.totalorder %s11, 1
    %p138 = por %p136, %p137
    %p139 = scmp.ne.s32.totalorder %s131, %s134
    %p140 = scmp.eq.s32.totalorder %s11, 0
    %p141 = por %p139, %p140
    %p142 = scmp.ne.s32.totalorder %s131, %s134
    %p143 = scmp.eq.s32.totalorder %s16, 1
    %p144 = por %p142, %p143
    %p145 = scmp.ne.s32.totalorder %s134, %s135
    %p146 = scmp.eq.s32.totalorder %s16, 0
    %p147 = por %p145, %p146
    %p148 = scmp.ne.s32.totalorder %s134, %s135
    %p149 = scmp.eq.s32.totalorder %s17, 1
    %p150 = por %p148, %p149
    %p152 = scmp.ne.s32.totalorder %s135, %s151
    %p153 = scmp.eq.s32.totalorder %s17, 0
    %p154 = por %p152, %p153
    %p155 = scmp.le.s32.totalorder 1, %s11
    %p156 = scmp.lt.s32.totalorder %s11, 3
    %p157 = pnand %p155, %p156
    %p158 = pneg %p157
    // Predicated region
    $region9: #{densenet_forward.1} parent=5 // pred_check
      _
    $region10: #{densenet_forward.1} parent=5 // pred_check_branch
      %160 = sbr.rel (%p157) target = $region12
    $region11: #{densenet_forward.1} parent=5 // pred_region
      %s161 = ssub.s32 %s11, 1
      // Predicated region
      $region13: #{densenet_forward.1} parent=11 // pred_check
        %p162 = pneg %p58
      $region14: #{densenet_forward.1} parent=11 // pred_check_branch
        %164 = sbr.rel (%p162) target = $region16
      $region15: #{densenet_forward.1} parent=11 // pred_region
        _
      $region16: #{densenet_forward.1} parent=11 // pred_fallthru
        _
      // Predicated region
      $region17: #{densenet_forward.1} parent=11 // pred_check
        %p165 = pneg %p79
      $region18: #{densenet_forward.1} parent=11 // pred_check_branch
        %167 = sbr.rel (%p165) target = $region20
      $region19: #{densenet_forward.1} parent=11 // pred_region
        _
      $region20: #{densenet_forward.1} parent=11 // pred_fallthru
        _
      // Predicated region
      $region21: #{densenet_forward.1} parent=11 // pred_check
        %p168 = pneg %p100
      $region22: #{densenet_forward.1} parent=11 // pred_check_branch
        %170 = sbr.rel (%p168) target = $region24
      $region23: #{densenet_forward.1} parent=11 // pred_region
        _
      $region24: #{densenet_forward.1} parent=11 // pred_fallthru
        _
      // Predicated region
      $region25: #{densenet_forward.1} parent=11 // pred_check
        %p171 = pneg %p121
      $region26: #{densenet_forward.1} parent=11 // pred_check_branch
        %173 = sbr.rel (%p171) target = $region28
      $region27: #{densenet_forward.1} parent=11 // pred_region
        _
      $region28: #{densenet_forward.1} parent=11 // pred_fallthru
        _
    $region12: #{densenet_forward.1} parent=5 // pred_fallthru
      _
    %p174 = scmp.lt.s32.totalorder %s11, 2
    // Predicated region
    $region29: #{densenet_forward.1} parent=5 // pred_check
      %p175 = pneg %p174
    $region30: #{densenet_forward.1} parent=5 // pred_check_branch
      %177 = sbr.rel (%p175) target = $region32
    $region31: #{densenet_forward.1} parent=5 // pred_region
      // Predicated region
      $region33: #{densenet_forward.1} parent=31 // pred_check
        %p178 = pneg %p31
      $region34: #{densenet_forward.1} parent=31 // pred_check_branch
        %180 = sbr.rel (%p178) target = $region36
      $region35: #{densenet_forward.1} parent=31 // pred_region
        %s181 = smul.u32 16, %s11
        %p182 = scmp.lt.s32.totalorder %s181, 31
        %s183 = scalar_select %p182, %s181, 31
        %s184 = smul.addr %s183, 4
        %s185 = scalar_lea.vmem %s0, %s184
        %s186 = smul.u32 16, %s11
      $region36: #{densenet_forward.1} parent=31 // pred_fallthru
        _
    $region32: #{densenet_forward.1} parent=5 // pred_fallthru
      _
    %p187 = scmp.le.s32.totalorder 1, %s11
    %p188 = scmp.lt.s32.totalorder %s11, 3
    %p189 = pnand %p187, %p188
    %p190 = pneg %p189
    // Predicated region
    $region37: #{densenet_forward.1} parent=5 // pred_check
      _
    $region38: #{densenet_forward.1} parent=5 // pred_check_branch
      %192 = sbr.rel (%p189) target = $region40
    $region39: #{densenet_forward.1} parent=5 // pred_region
      %s193 = ssub.s32 %s11, 1
      %s194 = smul.u32 16, %s16
      %p195 = scmp.lt.s32.totalorder %s194, 31
      %s196 = scalar_select %p195, %s194, 31
      %s197 = smul.addr %s196, 4
      %s198 = scalar_lea.vmem %s0, %s197
      %p199 = pneg %p37
      %p200 = pneg %p34
      %p201 = pneg %p58
      %p202 = pneg %p55
      %p203 = pneg %p79
      %p204 = pneg %p76
      %p205 = pneg %p100
      %p206 = pneg %p97
      %p207 = pneg %p121
      %p208 = pneg %p118
      %p209 = pneg %p147
      %p210 = pneg %p144
      %s211 = smul.u32 2, %s16
      %p212 = scmp.lt.s32.totalorder %s211, 3
      %s213 = scalar_select %p212, %s211, 3
      %s214 = smul.addr %s213, 8
      %s215 = scalar_lea.vmem %s5, %s214
      %s216 = smul.u32 16, %s16
      %p217 = scmp.lt.s32.totalorder %s216, 31
      %s218 = scalar_select %p217, %s216, 31
      %s219 = smul.addr %s218, 4
      %s220 = scalar_lea.vmem %s0, %s219
      %s221 = smul.u32 16, %s16
      %s222 = smul.u32 2, %s16
      %p223 = scmp.lt.s32.totalorder %s222, 3
      %s224 = scalar_select %p223, %s222, 3
      %s225 = smul.addr %s224, 8
      %s226 = scalar_lea.vmem %s5, %s225
      %s227 = smul.u32 2, %s16
      %v229 = vld [vmem:[%s220] sm:$0xf]
      %v230 = vld [vmem:[%s220 + $0x4] sm:$0xf]
      %v231 = vld [vmem:[%s220 + $0x8] sm:$0xf]
      %v232 = vld [vmem:[%s220 + $0xc] sm:$0xf]
      %v233 = vld [vmem:[%s220 + $0x10] sm:$0xf]
      %v234 = vld [vmem:[%s220 + $0x14] sm:$0xf]
      %v235 = vld [vmem:[%s220 + $0x18] sm:$0xf]
      %v236 = vld [vmem:[%s220 + $0x1c] sm:$0xf]
      %v237 = vld [vmem:[%s220 + $0x20] sm:$0xf]
      %v238 = vld [vmem:[%s220 + $0x24] sm:$0xf]
      %v239 = vld [vmem:[%s220 + $0x28] sm:$0xf]
      %v240 = vld [vmem:[%s220 + $0x2c] sm:$0xf]
      %v241 = vld [vmem:[%s220 + $0x30] sm:$0xf]
      %v242 = vld [vmem:[%s220 + $0x34] sm:$0xf]
      %v243 = vld [vmem:[%s220 + $0x38] sm:$0xf]
      %v244 = vld [vmem:[%s220 + $0x3c] sm:$0xf]
      %v245 = vld [vmem:[%s1] sm:$0xf]
      %v246 = vld [vmem:[%s1 + $0x4] sm:$0xf]
      %v247 = vld [vmem:[%s1 + $0x8] sm:$0xf]
      %v248 = vld [vmem:[%s1 + $0xc] sm:$0xf]
      %v249 = vld [vmem:[%s1 + $0x10] sm:$0xf]
      %v250 = vld [vmem:[%s1 + $0x14] sm:$0xf]
      %v251 = vld [vmem:[%s1 + $0x18] sm:$0xf]
      %v252 = vld [vmem:[%s1 + $0x1c] sm:$0xf]
      %v253 = vld [vmem:[%s1 + $0x20] sm:$0xf]
      %v254 = vld [vmem:[%s1 + $0x24] sm:$0xf]
      %v255 = vld [vmem:[%s1 + $0x28] sm:$0xf]
      %v256 = vld [vmem:[%s1 + $0x2c] sm:$0xf]
      %v257 = vld [vmem:[%s1 + $0x30] sm:$0xf]
      %v258 = vld [vmem:[%s1 + $0x34] sm:$0xf]
      %v259 = vld [vmem:[%s1 + $0x38] sm:$0xf]
      %v260 = vld [vmem:[%s1 + $0x3c] sm:$0xf]
      %v261 = vld [vmem:[%s2] sm:$0x1]
      %v263 = vlaneseq
      %v264 = vshrl.u32 %v263, 7
      %v265 = vsub.s32 0, %v264
      %v266 = vrot.slane %v261, %v265
      %v284 = vunpack.c.l.b16 %v229
      %v285 = vunpack.c.l.b16 %v230
      %v286 = vunpack.c.l.b16 %v231
      %v287 = vunpack.c.l.b16 %v232
      %v288 = vunpack.c.l.b16 %v233
      %v289 = vunpack.c.l.b16 %v234
      %v290 = vunpack.c.l.b16 %v235
      %v291 = vunpack.c.l.b16 %v236
      %v292 = vunpack.c.l.b16 %v237
      %v293 = vunpack.c.l.b16 %v238
      %v294 = vunpack.c.l.b16 %v239
      %v295 = vunpack.c.l.b16 %v240
      %v296 = vunpack.c.l.b16 %v241
      %v297 = vunpack.c.l.b16 %v242
      %v298 = vunpack.c.l.b16 %v243
      %v299 = vunpack.c.l.b16 %v244
      %v300 = vpack.c.b16 %v285, %v284
      %v301 = vpack.c.b16 %v287, %v286
      %v302 = vpack.c.b16 %v289, %v288
      %v303 = vpack.c.b16 %v291, %v290
      %v304 = vpack.c.b16 %v293, %v292
      %v305 = vpack.c.b16 %v295, %v294
      %v306 = vpack.c.b16 %v297, %v296
      %v307 = vpack.c.b16 %v299, %v298
      %v332 = vunpack.c.l.b16 %v245
      %v333 = vunpack.c.l.b16 %v246
      %v334 = vunpack.c.l.b16 %v247
      %v335 = vunpack.c.l.b16 %v248
      %v336 = vunpack.c.l.b16 %v249
      %v337 = vunpack.c.l.b16 %v250
      %v338 = vunpack.c.l.b16 %v251
      %v339 = vunpack.c.l.b16 %v252
      %v340 = vunpack.c.l.b16 %v253
      %v341 = vunpack.c.l.b16 %v254
      %v342 = vunpack.c.l.b16 %v255
      %v343 = vunpack.c.l.b16 %v256
      %v344 = vunpack.c.l.b16 %v257
      %v345 = vunpack.c.l.b16 %v258
      %v346 = vunpack.c.l.b16 %v259
      %v347 = vunpack.c.l.b16 %v260
      %v348 = vpack.c.b16 %v333, %v332
      %v349 = vpack.c.b16 %v335, %v334
      %v350 = vpack.c.b16 %v337, %v336
      %v351 = vpack.c.b16 %v339, %v338
      %v352 = vpack.c.b16 %v341, %v340
      %v353 = vpack.c.b16 %v343, %v342
      %v354 = vpack.c.b16 %v345, %v344
      %v355 = vpack.c.b16 %v347, %v346
      %364 = vmatprep.subr.bf16.mxu0 0
      %365 = vmatpush1.bf16.msra.mxu0 %v348
      %366 = vmatprep.subr.bf16.mxu0 0
      %367 = vmatpush1.bf16.msra.mxu0 %v349
      %368 = vmatprep.subr.bf16.mxu0 0
      %369 = vmatpush1.bf16.msra.mxu0 %v350
      %370 = vmatprep.subr.bf16.mxu0 0
      %371 = vmatpush1.bf16.msra.mxu0 %v351
      %372 = vmatprep.subr.bf16.mxu0 0
      %373 = vmatpush1.bf16.msra.mxu0 %v352
      %374 = vmatprep.subr.bf16.mxu0 0
      %375 = vmatpush1.bf16.msra.mxu0 %v353
      %376 = vmatprep.subr.bf16.mxu0 0
      %377 = vmatpush1.bf16.msra.mxu0 %v354
      %378 = vmatprep.subr.bf16.mxu0 0
      %379 = vmatpush1.bf16.msra.mxu0 %v355
      %380 = vmatprep.subr.bf16.mxu0 0
      %381 = vmatpush1.bf16.msra.mxu0 0
      %382 = vmatprep.subr.bf16.mxu0 0
      %383 = vmatpush1.bf16.msra.mxu0 0
      %384 = vmatprep.subr.bf16.mxu0 0
      %385 = vmatpush1.bf16.msra.mxu0 0
      %386 = vmatprep.subr.bf16.mxu0 0
      %387 = vmatpush1.bf16.msra.mxu0 0
      %388 = vmatprep.subr.bf16.mxu0 0
      %389 = vmatpush1.bf16.msra.mxu0 0
      %390 = vmatprep.subr.bf16.mxu0 0
      %391 = vmatpush1.bf16.msra.mxu0 0
      %392 = vmatprep.subr.bf16.mxu0 0
      %393 = vmatpush1.bf16.msra.mxu0 0
      %394 = vmatprep.subr.bf16.mxu0 0
      %395 = vmatpush1.bf16.msra.mxu0 0
      %396 = vmatprep.mubr.bf16.mxu0 0
      %397 = vmatmul.mubr.bf16.gmra.mrb[0].mxu0 %v300
      %v398 = vpop.f32.mrb[0].mxu0
      %v399 = vadd.f32 %v266, %v398
      %v400 = vpop.f32.mrb[0].mxu0
      %v401 = vpop.f32.mrb[0].mxu0
      %v402 = vadd.f32 %v266, %v401
      %v403 = vpop.f32.mrb[0].mxu0
      %404 = vmatprep.mubr.bf16.mxu0 0
      %405 = vmatmul.mubr.bf16.gmra.mrb[0].mxu0 %v301
      %v406 = vpop.f32.mrb[0].mxu0
      %v407 = vadd.f32 %v266, %v406
      %v408 = vpop.f32.mrb[0].mxu0
      %v409 = vpop.f32.mrb[0].mxu0
      %v410 = vadd.f32 %v266, %v409
      %v411 = vpop.f32.mrb[0].mxu0
      %412 = vmatprep.mubr.bf16.mxu0 0
      %413 = vmatmul.mubr.bf16.gmra.mrb[0].mxu0 %v302
      %v414 = vpop.f32.mrb[0].mxu0
      %v415 = vadd.f32 %v266, %v414
      %v416 = vpop.f32.mrb[0].mxu0
      %v417 = vpop.f32.mrb[0].mxu0
      %v418 = vadd.f32 %v266, %v417
      %v419 = vpop.f32.mrb[0].mxu0
      %420 = vmatprep.mubr.bf16.mxu0 0
      %421 = vmatmul.mubr.bf16.gmra.mrb[0].mxu0 %v303
      %v422 = vpop.f32.mrb[0].mxu0
      %v423 = vadd.f32 %v266, %v422
      %v424 = vpop.f32.mrb[0].mxu0
      %v425 = vpop.f32.mrb[0].mxu0
      %v426 = vadd.f32 %v266, %v425
      %v427 = vpop.f32.mrb[0].mxu0
      %428 = vmatprep.mubr.bf16.mxu0 0
      %429 = vmatmul.mubr.bf16.gmra.mrb[0].mxu0 %v304
      %v430 = vpop.f32.mrb[0].mxu0
      %v431 = vadd.f32 %v266, %v430
      %v432 = vpop.f32.mrb[0].mxu0
      %v433 = vpop.f32.mrb[0].mxu0
      %v434 = vadd.f32 %v266, %v433
      %v435 = vpop.f32.mrb[0].mxu0
      %436 = vmatprep.mubr.bf16.mxu0 0
      %437 = vmatmul.mubr.bf16.gmra.mrb[0].mxu0 %v305
      %v438 = vpop.f32.mrb[0].mxu0
      %v439 = vadd.f32 %v266, %v438
      %v440 = vpop.f32.mrb[0].mxu0
      %v441 = vpop.f32.mrb[0].mxu0
      %v442 = vadd.f32 %v266, %v441
      %v443 = vpop.f32.mrb[0].mxu0
      %444 = vmatprep.mubr.bf16.mxu0 0
      %445 = vmatmul.mubr.bf16.gmra.mrb[0].mxu0 %v306
      %v446 = vpop.f32.mrb[0].mxu0
      %v447 = vadd.f32 %v266, %v446
      %v448 = vpop.f32.mrb[0].mxu0
      %v449 = vpop.f32.mrb[0].mxu0
      %v450 = vadd.f32 %v266, %v449
      %v451 = vpop.f32.mrb[0].mxu0
      %452 = vmatprep.mubr.bf16.mxu0 0
      %453 = vmatmul.mubr.bf16.gmra.mrb[0].mxu0 %v307
      %v454 = vpop.f32.mrb[0].mxu0
      %v455 = vadd.f32 %v266, %v454
      %v456 = vpop.f32.mrb[0].mxu0
      %v457 = vpop.f32.mrb[0].mxu0
      %v458 = vadd.f32 %v266, %v457
      %v459 = vpop.f32.mrb[0].mxu0
      %460 = vdwg.mxu0
      %v461 = vmax.f32 %v399, 0.0
      %v462 = vmax.f32 %v402, 0.0
      %v463 = vmax.f32 %v407, 0.0
      %v464 = vmax.f32 %v410, 0.0
      %v465 = vmax.f32 %v415, 0.0
      %v466 = vmax.f32 %v418, 0.0
      %v467 = vmax.f32 %v423, 0.0
      %v468 = vmax.f32 %v426, 0.0
      %v469 = vmax.f32 %v431, 0.0
      %v470 = vmax.f32 %v434, 0.0
      %v471 = vmax.f32 %v439, 0.0
      %v472 = vmax.f32 %v442, 0.0
      %v473 = vmax.f32 %v447, 0.0
      %v474 = vmax.f32 %v450, 0.0
      %v475 = vmax.f32 %v455, 0.0
      %v476 = vmax.f32 %v458, 0.0
      %v477 = vpack.c.bf16 %v462, %v461
      %v478 = vpack.c.bf16 %v464, %v463
      %v479 = vpack.c.bf16 %v466, %v465
      %v480 = vpack.c.bf16 %v468, %v467
      %v481 = vpack.c.bf16 %v470, %v469
      %v482 = vpack.c.bf16 %v472, %v471
      %v483 = vpack.c.bf16 %v474, %v473
      %v484 = vpack.c.bf16 %v476, %v475
      %v485 = vld [vmem:[%s3] sm:$0xf]
      %v486 = vld [vmem:[%s3 + $0x4] sm:$0xf]
      %v487 = vld [vmem:[%s3 + $0x8] sm:$0xf]
      %v488 = vld [vmem:[%s3 + $0xc] sm:$0xf]
      %v489 = vld [vmem:[%s3 + $0x10] sm:$0xf]
      %v490 = vld [vmem:[%s3 + $0x14] sm:$0xf]
      %v491 = vld [vmem:[%s3 + $0x18] sm:$0xf]
      %v492 = vld [vmem:[%s3 + $0x1c] sm:$0xf]
      %v493 = vld [vmem:[%s3 + $0x20] sm:$0xf]
      %v494 = vld [vmem:[%s3 + $0x24] sm:$0xf]
      %v495 = vld [vmem:[%s3 + $0x28] sm:$0xf]
      %v496 = vld [vmem:[%s3 + $0x2c] sm:$0xf]
      %v497 = vld [vmem:[%s3 + $0x30] sm:$0xf]
      %v498 = vld [vmem:[%s3 + $0x34] sm:$0xf]
      %v499 = vld [vmem:[%s3 + $0x38] sm:$0xf]
      %v500 = vld [vmem:[%s3 + $0x3c] sm:$0xf]
      %v517 = vunpack.c.l.b16 %v485
      %v518 = vunpack.c.l.b16 %v486
      %v519 = vunpack.c.l.b16 %v487
      %v520 = vunpack.c.l.b16 %v488
      %v521 = vunpack.c.l.b16 %v489
      %v522 = vunpack.c.l.b16 %v490
      %v523 = vunpack.c.l.b16 %v491
      %v524 = vunpack.c.l.b16 %v492
      %v525 = vunpack.c.l.b16 %v493
      %v526 = vunpack.c.l.b16 %v494
      %v527 = vunpack.c.l.b16 %v495
      %v528 = vunpack.c.l.b16 %v496
      %v529 = vunpack.c.l.b16 %v497
      %v530 = vunpack.c.l.b16 %v498
      %v531 = vunpack.c.l.b16 %v499
      %v532 = vunpack.c.l.b16 %v500
      %v533 = vpack.c.b16 %v518, %v517
      %v534 = vpack.c.b16 %v520, %v519
      %v535 = vpack.c.b16 %v522, %v521
      %v536 = vpack.c.b16 %v524, %v523
      %v537 = vpack.c.b16 %v526, %v525
      %v538 = vpack.c.b16 %v528, %v527
      %v539 = vpack.c.b16 %v530, %v529
      %v540 = vpack.c.b16 %v532, %v531
      %549 = vmatprep.subr.bf16.mxu0 0
      %550 = vmatpush1.bf16.msra.mxu0 %v533
      %551 = vmatprep.subr.bf16.mxu0 0
      %552 = vmatpush1.bf16.msra.mxu0 %v534
      %553 = vmatprep.subr.bf16.mxu0 0
      %554 = vmatpush1.bf16.msra.mxu0 %v535
      %555 = vmatprep.subr.bf16.mxu0 0
      %556 = vmatpush1.bf16.msra.mxu0 %v536
      %557 = vmatprep.subr.bf16.mxu0 0
      %558 = vmatpush1.bf16.msra.mxu0 %v537
      %559 = vmatprep.subr.bf16.mxu0 0
      %560 = vmatpush1.bf16.msra.mxu0 %v538
      %561 = vmatprep.subr.bf16.mxu0 0
      %562 = vmatpush1.bf16.msra.mxu0 %v539
      %563 = vmatprep.subr.bf16.mxu0 0
      %564 = vmatpush1.bf16.msra.mxu0 %v540
      %565 = vmatprep.subr.bf16.mxu0 0
      %566 = vmatpush1.bf16.msra.mxu0 0
      %567 = vmatprep.subr.bf16.mxu0 0
      %568 = vmatpush1.bf16.msra.mxu0 0
      %569 = vmatprep.subr.bf16.mxu0 0
      %570 = vmatpush1.bf16.msra.mxu0 0
      %571 = vmatprep.subr.bf16.mxu0 0
      %572 = vmatpush1.bf16.msra.mxu0 0
      %573 = vmatprep.subr.bf16.mxu0 0
      %574 = vmatpush1.bf16.msra.mxu0 0
      %575 = vmatprep.subr.bf16.mxu0 0
      %576 = vmatpush1.bf16.msra.mxu0 0
      %577 = vmatprep.subr.bf16.mxu0 0
      %578 = vmatpush1.bf16.msra.mxu0 0
      %579 = vmatprep.subr.bf16.mxu0 0
      %580 = vmatpush1.bf16.msra.mxu0 0
      %581 = vmatprep.mubr.bf16.mxu0 0
      %582 = vmatmul.mubr.bf16.gmra.mrb[0].mxu0 %v477
      %v583 = vpop.f32.mrb[0].mxu0
      %v584 = vadd.f32 0.0, %v583
      %v585 = vpop.f32.mrb[0].mxu0
      %v586 = vpop.f32.mrb[0].mxu0
      %v587 = vadd.f32 0.0, %v586
      %v588 = vpop.f32.mrb[0].mxu0
      %589 = vmatprep.mubr.bf16.mxu0 0
      %590 = vmatmul.mubr.bf16.gmra.mrb[0].mxu0 %v478
      %v591 = vpop.f32.mrb[0].mxu0
      %v592 = vadd.f32 0.0, %v591
      %v593 = vpop.f32.mrb[0].mxu0
      %v594 = vpop.f32.mrb[0].mxu0
      %v595 = vadd.f32 0.0, %v594
      %v596 = vpop.f32.mrb[0].mxu0
      %597 = vmatprep.mubr.bf16.mxu0 0
      %598 = vmatmul.mubr.bf16.gmra.mrb[0].mxu0 %v479
      %v599 = vpop.f32.mrb[0].mxu0
      %v600 = vadd.f32 0.0, %v599
      %v601 = vpop.f32.mrb[0].mxu0
      %v602 = vpop.f32.mrb[0].mxu0
      %v603 = vadd.f32 0.0, %v602
      %v604 = vpop.f32.mrb[0].mxu0
      %605 = vmatprep.mubr.bf16.mxu0 0
      %606 = vmatmul.mubr.bf16.gmra.mrb[0].mxu0 %v480
      %v607 = vpop.f32.mrb[0].mxu0
      %v608 = vadd.f32 0.0, %v607
      %v609 = vpop.f32.mrb[0].mxu0
      %v610 = vpop.f32.mrb[0].mxu0
      %v611 = vadd.f32 0.0, %v610
      %v612 = vpop.f32.mrb[0].mxu0
      %613 = vmatprep.mubr.bf16.mxu0 0
      %614 = vmatmul.mubr.bf16.gmra.mrb[0].mxu0 %v481
      %v615 = vpop.f32.mrb[0].mxu0
      %v616 = vadd.f32 0.0, %v615
      %v617 = vpop.f32.mrb[0].mxu0
      %v618 = vpop.f32.mrb[0].mxu0
      %v619 = vadd.f32 0.0, %v618
      %v620 = vpop.f32.mrb[0].mxu0
      %621 = vmatprep.mubr.bf16.mxu0 0
      %622 = vmatmul.mubr.bf16.gmra.mrb[0].mxu0 %v482
      %v623 = vpop.f32.mrb[0].mxu0
      %v624 = vadd.f32 0.0, %v623
      %v625 = vpop.f32.mrb[0].mxu0
      %v626 = vpop.f32.mrb[0].mxu0
      %v627 = vadd.f32 0.0, %v626
      %v628 = vpop.f32.mrb[0].mxu0
      %629 = vmatprep.mubr.bf16.mxu0 0
      %630 = vmatmul.mubr.bf16.gmra.mrb[0].mxu0 %v483
      %v631 = vpop.f32.mrb[0].mxu0
      %v632 = vadd.f32 0.0, %v631
      %v633 = vpop.f32.mrb[0].mxu0
      %v634 = vpop.f32.mrb[0].mxu0
      %v635 = vadd.f32 0.0, %v634
      %v636 = vpop.f32.mrb[0].mxu0
      %637 = vmatprep.mubr.bf16.mxu0 0
      %638 = vmatmul.mubr.bf16.gmra.mrb[0].mxu0 %v484
      %v639 = vpop.f32.mrb[0].mxu0
      %v640 = vadd.f32 0.0, %v639
      %v641 = vpop.f32.mrb[0].mxu0
      %v642 = vpop.f32.mrb[0].mxu0
      %v643 = vadd.f32 0.0, %v642
      %v644 = vpop.f32.mrb[0].mxu0
      %645 = vdwg.mxu0
      %v646 = vrot.slane %v584, 4
      %v647 = vadd.f32 %v584, %v646
      %v648 = vrot.slane %v647, 2
      %v649 = vadd.f32 %v647, %v648
      %v650 = vrot.slane %v649, 1
      %v651 = vadd.f32 %v649, %v650
      %v652 = vrot.slane %v587, 4
      %v653 = vadd.f32 %v587, %v652
      %v654 = vrot.slane %v653, 2
      %v655 = vadd.f32 %v653, %v654
      %v656 = vrot.slane %v655, 1
      %v657 = vadd.f32 %v655, %v656
      %v658 = vrot.slane %v592, 4
      %v659 = vadd.f32 %v592, %v658
      %v660 = vrot.slane %v659, 2
      %v661 = vadd.f32 %v659, %v660
      %v662 = vrot.slane %v661, 1
      %v663 = vadd.f32 %v661, %v662
      %v664 = vrot.slane %v595, 4
      %v665 = vadd.f32 %v595, %v664
      %v666 = vrot.slane %v665, 2
      %v667 = vadd.f32 %v665, %v666
      %v668 = vrot.slane %v667, 1
      %v669 = vadd.f32 %v667, %v668
      %v670 = vrot.slane %v600, 4
      %v671 = vadd.f32 %v600, %v670
      %v672 = vrot.slane %v671, 2
      %v673 = vadd.f32 %v671, %v672
      %v674 = vrot.slane %v673, 1
      %v675 = vadd.f32 %v673, %v674
      %v676 = vrot.slane %v603, 4
      %v677 = vadd.f32 %v603, %v676
      %v678 = vrot.slane %v677, 2
      %v679 = vadd.f32 %v677, %v678
      %v680 = vrot.slane %v679, 1
      %v681 = vadd.f32 %v679, %v680
      %v682 = vrot.slane %v608, 4
      %v683 = vadd.f32 %v608, %v682
      %v684 = vrot.slane %v683, 2
      %v685 = vadd.f32 %v683, %v684
      %v686 = vrot.slane %v685, 1
      %v687 = vadd.f32 %v685, %v686
      %v688 = vrot.slane %v611, 4
      %v689 = vadd.f32 %v611, %v688
      %v690 = vrot.slane %v689, 2
      %v691 = vadd.f32 %v689, %v690
      %v692 = vrot.slane %v691, 1
      %v693 = vadd.f32 %v691, %v692
      %v694 = vrot.slane %v616, 4
      %v695 = vadd.f32 %v616, %v694
      %v696 = vrot.slane %v695, 2
      %v697 = vadd.f32 %v695, %v696
      %v698 = vrot.slane %v697, 1
      %v699 = vadd.f32 %v697, %v698
      %v700 = vrot.slane %v619, 4
      %v701 = vadd.f32 %v619, %v700
      %v702 = vrot.slane %v701, 2
      %v703 = vadd.f32 %v701, %v702
      %v704 = vrot.slane %v703, 1
      %v705 = vadd.f32 %v703, %v704
      %v706 = vrot.slane %v624, 4
      %v707 = vadd.f32 %v624, %v706
      %v708 = vrot.slane %v707, 2
      %v709 = vadd.f32 %v707, %v708
      %v710 = vrot.slane %v709, 1
      %v711 = vadd.f32 %v709, %v710
      %v712 = vrot.slane %v627, 4
      %v713 = vadd.f32 %v627, %v712
      %v714 = vrot.slane %v713, 2
      %v715 = vadd.f32 %v713, %v714
      %v716 = vrot.slane %v715, 1
      %v717 = vadd.f32 %v715, %v716
      %v718 = vrot.slane %v632, 4
      %v719 = vadd.f32 %v632, %v718
      %v720 = vrot.slane %v719, 2
      %v721 = vadd.f32 %v719, %v720
      %v722 = vrot.slane %v721, 1
      %v723 = vadd.f32 %v721, %v722
      %v724 = vrot.slane %v635, 4
      %v725 = vadd.f32 %v635, %v724
      %v726 = vrot.slane %v725, 2
      %v727 = vadd.f32 %v725, %v726
      %v728 = vrot.slane %v727, 1
      %v729 = vadd.f32 %v727, %v728
      %v730 = vrot.slane %v640, 4
      %v731 = vadd.f32 %v640, %v730
      %v732 = vrot.slane %v731, 2
      %v733 = vadd.f32 %v731, %v732
      %v734 = vrot.slane %v733, 1
      %v735 = vadd.f32 %v733, %v734
      %v736 = vrot.slane %v643, 4
      %v737 = vadd.f32 %v643, %v736
      %v738 = vrot.slane %v737, 2
      %v739 = vadd.f32 %v737, %v738
      %v740 = vrot.slane %v739, 1
      %v741 = vadd.f32 %v739, %v740
      %v742 = vld [vmem:[%s4] sm:$0x1]
      %v744 = vlaneseq
      %v745 = vshrl.u32 %v744, 7
      %v746 = vsub.s32 0, %v745
      %v747 = vrot.slane %v742, %v746
      %v749 = vadd.f32 %v651, %v747
      %v750 = vadd.f32 %v657, %v747
      %v751 = vadd.f32 %v663, %v747
      %v752 = vadd.f32 %v669, %v747
      %v753 = vadd.f32 %v675, %v747
      %v754 = vadd.f32 %v681, %v747
      %v755 = vadd.f32 %v687, %v747
      %v756 = vadd.f32 %v693, %v747
      %v757 = vadd.f32 %v699, %v747
      %v758 = vadd.f32 %v705, %v747
      %v759 = vadd.f32 %v711, %v747
      %v760 = vadd.f32 %v717, %v747
      %v761 = vadd.f32 %v723, %v747
      %v762 = vadd.f32 %v729, %v747
      %v763 = vadd.f32 %v735, %v747
      %v764 = vadd.f32 %v741, %v747
      %v781 = vrot.slane %v750, 7
      %vm782 = vcmask 1041409
      %v783 = vsel %vm782, %v781, %v749
      %v784 = vrot.slane %v751, 6
      %vm785 = vcmask 1042434
      %v786 = vsel %vm785, %v784, %v783
      %v787 = vrot.slane %v752, 5
      %vm788 = vcmask 1043459
      %v789 = vsel %vm788, %v787, %v786
      %v790 = vrot.slane %v753, 4
      %vm791 = vcmask 1044484
      %v792 = vsel %vm791, %v790, %v789
      %v793 = vrot.slane %v754, 3
      %vm794 = vcmask 1045509
      %v795 = vsel %vm794, %v793, %v792
      %v796 = vrot.slane %v755, 2
      %vm797 = vcmask 1046534
      %v798 = vsel %vm797, %v796, %v795
      %v799 = vrot.slane %v756, 1
      %vm800 = vcmask 1047559
      %v801 = vsel %vm800, %v799, %v798
      %v802 = vrot.slane %v758, 7
      %v803 = vsel %vm782, %v802, %v757
      %v804 = vrot.slane %v759, 6
      %v805 = vsel %vm785, %v804, %v803
      %v806 = vrot.slane %v760, 5
      %v807 = vsel %vm788, %v806, %v805
      %v808 = vrot.slane %v761, 4
      %v809 = vsel %vm791, %v808, %v807
      %v810 = vrot.slane %v762, 3
      %v811 = vsel %vm794, %v810, %v809
      %v812 = vrot.slane %v763, 2
      %v813 = vsel %vm797, %v812, %v811
      %v814 = vrot.slane %v764, 1
      %v815 = vsel %vm800, %v814, %v813
      %818 = vst [vmem:[%s226] sm:$0xff] %v801
      %819 = vst [vmem:[%s226 + $0x8] sm:$0xff] %v815
      %s820 = smul.u32 2, %s16
      %p821 = scmp.lt.s32.totalorder %s820, 3
      %s822 = scalar_select %p821, %s820, 3
      %s823 = smul.addr %s822, 8
      %s824 = scalar_lea.vmem %s5, %s823
      // Predicated region
      $region41: #{densenet_forward.1} parent=39 // pred_check
        %p825 = pneg %p144
      $region42: #{densenet_forward.1} parent=39 // pred_check_branch
        %827 = sbr.rel (%p825) target = $region44
      $region43: #{densenet_forward.1} parent=39 // pred_region
        %s828 = smul.u32 2, %s16
      $region44: #{densenet_forward.1} parent=39 // pred_fallthru
        _
    $region40: #{densenet_forward.1} parent=5 // pred_fallthru
      _
    %p829 = scmp.le.s32.totalorder 2, %s11
    // Predicated region
    $region45: #{densenet_forward.1} parent=5 // pred_check
      %p830 = pneg %p829
    $region46: #{densenet_forward.1} parent=5 // pred_check_branch
      %832 = sbr.rel (%p830) target = $region48
    $region47: #{densenet_forward.1} parent=5 // pred_region
      %s833 = ssub.s32 %s11, 2
      // Predicated region
      $region49: #{densenet_forward.1} parent=47 // pred_check
        %p834 = pneg %p150
      $region50: #{densenet_forward.1} parent=47 // pred_check_branch
        %836 = sbr.rel (%p834) target = $region52
      $region51: #{densenet_forward.1} parent=47 // pred_region
        %s837 = smul.u32 2, %s17
        %p838 = scmp.lt.s32.totalorder %s837, 3
        %s839 = scalar_select %p838, %s837, 3
        %s840 = smul.addr %s839, 8
        %s841 = scalar_lea.vmem %s5, %s840
      $region52: #{densenet_forward.1} parent=47 // pred_fallthru
        _
    $region48: #{densenet_forward.1} parent=5 // pred_fallthru
      _
  $region6: #{densenet_forward.1} parent=0 // loop_footer
    %s15 = sadd.s32 1, %s11
  $region7: #{densenet_forward.1} parent=0 // loop_footer_branch
    %10 = sbr.rel target = $region3
  $region8: #{densenet_forward.1} parent=0 // loop_exit
    _

</llo_original>
